<compile_context>
chip_gen: v7x
topology: tpu7x:2x2x1
jax: 0.10.0
libtpu: 0.0.40
codegen_flags: <defaults>
</compile_context>

<pallas_src>
import functools

import jax
import jax.numpy as jnp
from jax.experimental import pallas as pl
from jax.experimental.pallas import tpu as pltpu


def _round_up(x, m):
    return (x + m - 1) // m * m


def lgm_loss_kernel(alpha, lhs_ref, label_ref, rhs_ref, slog_ref, cconst_ref,
                    logits_ref, mlogits_ref):
    # Grid: axis 0 = class tile (outer), axis 1 = batch tile (inner).
    jc = pl.program_id(0)
    TB = lhs_ref.shape[0]
    TC = rhs_ref.shape[1]

    # Fused Mahalanobis-style distance via a single MXU matmul:
    #   dist = [feat^2, feat] @ [inv_cov ; -2*centers*inv_cov]^T + c_const
    dist = jnp.dot(lhs_ref[...], rhs_ref[...],
                   preferred_element_type=jnp.float32) + cconst_ref[...]   # (TB, TC)

    logits = -0.5 * (slog_ref[...] + dist)                                 # (TB, TC)
    logits_ref[...] = logits

    # margin_logits differs from logits only in the label column:
    #   margin_logits = logits - 0.5*alpha*dist  (at c == label), else logits.
    cls_ids = jax.lax.broadcasted_iota(jnp.int32, (TB, TC), 1) + jc * TC
    is_label = cls_ids == label_ref[...]          # (TB,TC) vs (TB,1) broadcast
    mlogits_ref[...] = jnp.where(is_label, logits - (0.5 * alpha) * dist, logits)


def lgm_loss(feat, label, centers, log_covs, alpha, *, tile_b=256, tile_c=1024):
    """Pallas wrapper. feat (B,D), label (B,), centers/log_covs (C,D)."""
    feat = feat.astype(jnp.float32)
    centers = centers.astype(jnp.float32)
    log_covs = log_covs.astype(jnp.float32)
    label = label.astype(jnp.int32)
    B, D = feat.shape
    C = centers.shape[0]

    # ---- per-class precompute (hoisted, O(C*D), runs once in XLA) ----------
    inv_cov = jnp.exp(-log_covs)                              # (C, D)
    wcen = centers * inv_cov                                  # (C, D)
    slog = jnp.sum(log_covs, axis=-1)                         # (C,)
    c_const = jnp.sum(centers * wcen, axis=-1)                # (C,)
    rhs = jnp.concatenate([inv_cov, -2.0 * wcen], axis=1).T   # (2D, C)

    # ---- per-sample precompute (fused-matmul LHS, O(B*D)) ------------------
    lhs = jnp.concatenate([feat * feat, feat], axis=1)        # (B, 2D)

    # ---- likelihood: O(B*D) gather + reduce, decoupled from the class dim --
    cdiff = feat - centers[label]
    cdist = 0.5 * jnp.sum(cdiff * cdiff)
    reg = 0.5 * jnp.sum(slog[label])
    likelihood = (cdist + reg) / B

    # ---- tiling -------------------------------------------------------------
    # Class tile: lane-dense multiple of 128.  Batch tile: multiple of 8,
    # chosen so there are >=2 batch tiles whenever B permits (v7x megacore).
    TC = _round_up(min(tile_c, _round_up(C, 128)), 128)
    TB = max(8, min(_round_up(tile_b, 8), _round_up(max(-(-B // 2), 1), 8)))

    def _est_bytes(tb, tc):
        # double-buffered I/O tiles + ~6 (TB,TC) f32 kernel intermediates
        return 4 * (2 * (tb * 2 * D)            # lhs
                    + 2 * tb                    # label
                    + 2 * (2 * D * tc)          # rhs
                    + 2 * 2 * tc                # slog + c_const
                    + 2 * 2 * (tb * tc)         # logits + margin_logits
                    + 6 * (tb * tc))            # dist / logits / iota / select temps

    try:
        phys = int(pltpu.get_tpu_info().vmem_capacity_bytes)
    except Exception:  # pragma: no cover - conservative fallback
        phys = 64 << 20
    cap = (phys // 8) * 7                       # headroom for compiler scratch

    while TC > 128 and int(1.5 * _est_bytes(TB, TC)) > cap:
        TC = max(128, _round_up(TC // 2, 128))
    while TB > 8 and int(1.5 * _est_bytes(TB, TC)) > cap:
        TB = max(8, _round_up(TB // 2, 8))

    Cp = _round_up(C, TC)
    Bp = _round_up(B, TB)
    nc = Cp // TC
    nb = Bp // TB

    # ---- pad to tile boundaries --------------------------------------------
    lhs_p = jnp.zeros((Bp, 2 * D), jnp.float32).at[:B].set(lhs)
    label_p = jnp.full((Bp, 1), -1, jnp.int32).at[:B, 0].set(label)
    rhs_p = jnp.zeros((2 * D, Cp), jnp.float32).at[:, :C].set(rhs)
    slog_p = jnp.zeros((1, Cp), jnp.float32).at[0, :C].set(slog)
    cconst_p = jnp.zeros((1, Cp), jnp.float32).at[0, :C].set(c_const)

    kernel = functools.partial(lgm_loss_kernel, float(alpha))

    # grid = (class tiles [outer], batch tiles [inner]); class-tile params stay
    # resident across the batch sweep, batch tiles are re-fetched (smaller).
    in_specs = [
        pl.BlockSpec((TB, 2 * D), lambda j, i: (i, 0)),   # lhs   (batch-tiled)
        pl.BlockSpec((TB, 1), lambda j, i: (i, 0)),       # label (batch-tiled)
        pl.BlockSpec((2 * D, TC), lambda j, i: (0, j)),   # rhs   (class-tiled)
        pl.BlockSpec((1, TC), lambda j, i: (0, j)),       # slog  (class-tiled)
        pl.BlockSpec((1, TC), lambda j, i: (0, j)),       # c_const
    ]
    out_specs = (
        pl.BlockSpec((TB, TC), lambda j, i: (i, j)),      # logits
        pl.BlockSpec((TB, TC), lambda j, i: (i, j)),      # margin_logits
    )
    out_shape = (
        jax.ShapeDtypeStruct((Bp, Cp), jnp.float32),
        jax.ShapeDtypeStruct((Bp, Cp), jnp.float32),
    )

    est = _est_bytes(TB, TC)
    vmem_limit = int(min(cap, max(32 << 20, int(1.5 * est))))

    logits_p, mlogits_p = pl.pallas_call(
        kernel,
        grid=(nc, nb),
        in_specs=in_specs,
        out_specs=out_specs,
        out_shape=out_shape,
        compiler_params=pltpu.CompilerParams(
            dimension_semantics=("parallel", "parallel"),
            vmem_limit_bytes=vmem_limit,
        ),
    )(lhs_p, label_p, rhs_p, slog_p, cconst_p)

    logits = logits_p[:B, :C]
    margin_logits = mlogits_p[:B, :C]
    return logits, margin_logits, likelihood


def lgm_loss_ref(feat, label, centers, log_covs, alpha):
    """Pure-JAX reference mirroring the PyTorch forward exactly."""
    B = feat.shape[0]
    C = centers.shape[0]
    covs = jnp.exp(log_covs)
    diff = feat[:, None, :] - centers[None, :, :]
    dist = jnp.sum(diff * (diff / covs[None, :, :]), axis=-1)
    y_onehot = jax.nn.one_hot(label, C, dtype=jnp.float32) * alpha + 1.0
    margin_dist = dist * y_onehot
    slog = jnp.sum(log_covs, axis=-1)
    tslog = jnp.broadcast_to(slog[None, :], (B, C))
    margin_logits = -0.5 * (tslog + margin_dist)
    logits = -0.5 * (tslog + dist)
    cdiff = feat - centers[label]
    cdist = jnp.sum(cdiff ** 2) / 2.0
    reg = 0.5 * jnp.sum(slog[label])
    likelihood = (cdist + reg) / B
    return logits, margin_logits, likelihood


if __name__ == "__main__":
    B, C, D = 8, 10, 32          # batch, num_classes, feat_dim
    alpha = 0.1

    key = jax.random.PRNGKey(0)
    k_feat, k_lbl, k_ctr = jax.random.split(key, 3)
    feat = jax.random.normal(k_feat, (B, D), dtype=jnp.float32)
    label = jax.random.randint(k_lbl, (B,), 0, C, dtype=jnp.int32)
    # Parameter shapes match nn.Parameter in __init__; non-trivial log_covs so
    # the covariance weighting / slog paths are exercised.
    centers = jax.random.normal(k_ctr, (C, D), dtype=jnp.float32)
    log_covs = 0.1 * jax.random.normal(jax.random.PRNGKey(1), (C, D), dtype=jnp.float32)

    logits, margin_logits, likelihood = lgm_loss(feat, label, centers, log_covs, alpha)
    jax.block_until_ready((logits, margin_logits, likelihood))

    # Correctness check against pure-JAX reference (quadratic expansion of the
    # distance in f32 -> slightly looser atol than the exact (f-mu)^2 form).
    r_logits, r_mlogits, r_lik = lgm_loss_ref(feat, label, centers, log_covs, alpha)
    assert jnp.allclose(logits, r_logits, atol=1e-3, rtol=1e-4)
    assert jnp.allclose(margin_logits, r_mlogits, atol=1e-3, rtol=1e-4)
    assert jnp.allclose(likelihood, r_lik, atol=1e-3, rtol=1e-4)

    print("KERNEL_OK")
</pallas_src>

<mosaic_0001>
module attributes {stable_mosaic.version = 11 : i64} {
  func.func @lgm_loss_kernel(%arg0: i32, %arg1: i32, %arg2: memref<8x64xf32, #tpu.memory_space<vmem>>, %arg3: memref<8x1xi32, #tpu.memory_space<vmem>>, %arg4: memref<64x128xf32, #tpu.memory_space<vmem>>, %arg5: memref<1x128xf32, #tpu.memory_space<vmem>>, %arg6: memref<1x128xf32, #tpu.memory_space<vmem>>, %arg7: memref<8x128xf32, #tpu.memory_space<vmem>>, %arg8: memref<8x128xf32, #tpu.memory_space<vmem>>) attributes {dimension_semantics = [#tpu.dimension_semantics<parallel>, #tpu.dimension_semantics<parallel>], iteration_bounds = array<i64: 1, 1>, scalar_prefetch = 0 : i64, scratch_operands = 0 : i64, tpu.core_type = #tpu.core_type<tc>, window_params = [{transform_indices = @transform_0, window_bounds = array<i64: 8, 64>}, {transform_indices = @transform_1, window_bounds = array<i64: 8, 1>}, {transform_indices = @transform_2, window_bounds = array<i64: 64, 128>}, {transform_indices = @transform_3, window_bounds = array<i64: 1, 128>}, {transform_indices = @transform_4, window_bounds = array<i64: 1, 128>}, {transform_indices = @transform_5, window_bounds = array<i64: 8, 128>}, {transform_indices = @transform_6, window_bounds = array<i64: 8, 128>}]} {
    %c0 = arith.constant 0 : index
    %c0_0 = arith.constant 0 : index
    %0 = vector.load %arg2[%c0, %c0_0] : memref<8x64xf32, #tpu.memory_space<vmem>>, vector<8x64xf32>
    %c0_1 = arith.constant 0 : index
    %c0_2 = arith.constant 0 : index
    %1 = vector.load %arg4[%c0_1, %c0_2] : memref<64x128xf32, #tpu.memory_space<vmem>>, vector<64x128xf32>
    %cst = arith.constant dense<0.000000e+00> : vector<8x128xf32>
    %2 = tpu.matmul %0, %1, %cst {dimension_numbers = #tpu.dot_dimension_numbers<[1], [0], [0], [1], [0, 0, 1, 1], [], []>} : vector<8x64xf32>, vector<64x128xf32>, vector<8x128xf32> -> vector<8x128xf32>
    %c0_3 = arith.constant 0 : index
    %c0_4 = arith.constant 0 : index
    %3 = vector.load %arg6[%c0_3, %c0_4] : memref<1x128xf32, #tpu.memory_space<vmem>>, vector<1x128xf32>
    %4 = vector.broadcast %3 : vector<1x128xf32> to vector<8x128xf32>
    %5 = arith.addf %2, %4 : vector<8x128xf32>
    %c0_5 = arith.constant 0 : index
    %c0_6 = arith.constant 0 : index
    %6 = vector.load %arg5[%c0_5, %c0_6] : memref<1x128xf32, #tpu.memory_space<vmem>>, vector<1x128xf32>
    %7 = vector.broadcast %6 : vector<1x128xf32> to vector<8x128xf32>
    %8 = arith.addf %7, %5 : vector<8x128xf32>
    %cst_7 = arith.constant -5.000000e-01 : f32
    %9 = vector.broadcast %cst_7 : f32 to vector<8x128xf32>
    %10 = arith.mulf %9, %8 : vector<8x128xf32>
    %c0_8 = arith.constant 0 : index
    %c0_9 = arith.constant 0 : index
    %11 = vector.load %arg7[%c0_8, %c0_9] : memref<8x128xf32, #tpu.memory_space<vmem>>, vector<8x128xf32>
    tpu.vector_store %arg7[%c0_8, %c0_9], %10 {strides = array<i32>} : memref<8x128xf32, #tpu.memory_space<vmem>>, vector<8x128xf32>,
    %12 = tpu.iota {dimensions = array<i32: 1>} : vector<8x128xi32>
    %c128_i32 = arith.constant 128 : i32
    %13 = arith.muli %arg0, %c128_i32 : i32
    %14 = vector.broadcast %13 : i32 to vector<8x128xi32>
    %15 = arith.addi %12, %14 : vector<8x128xi32>
    %c0_10 = arith.constant 0 : index
    %c0_11 = arith.constant 0 : index
    %16 = vector.load %arg3[%c0_10, %c0_11] : memref<8x1xi32, #tpu.memory_space<vmem>>, vector<8x1xi32>
    %17 = vector.broadcast %16 : vector<8x1xi32> to vector<8x128xi32>
    %18 = arith.cmpi eq, %15, %17 : vector<8x128xi32>
    %cst_12 = arith.constant 5.000000e-02 : f32
    %19 = vector.broadcast %cst_12 : f32 to vector<8x128xf32>
    %20 = arith.mulf %19, %5 : vector<8x128xf32>
    %21 = arith.subf %10, %20 : vector<8x128xf32>
    %22 = arith.select %18, %21, %10 : vector<8x128xi1>, vector<8x128xf32>
    %c0_13 = arith.constant 0 : index
    %c0_14 = arith.constant 0 : index
    %23 = vector.load %arg8[%c0_13, %c0_14] : memref<8x128xf32, #tpu.memory_space<vmem>>, vector<8x128xf32>
    tpu.vector_store %arg8[%c0_13, %c0_14], %22 {strides = array<i32>} : memref<8x128xf32, #tpu.memory_space<vmem>>, vector<8x128xf32>,
    return
  }
  func.func @transform_0(%arg0: i32, %arg1: i32) -> (i32, i32) {
    %c0_i32 = arith.constant 0 : i32
    %c0_i32_0 = arith.constant 0 : i32
    return %arg1, %c0_i32 : i32, i32
  }
  func.func @transform_1(%arg0: i32, %arg1: i32) -> (i32, i32) {
    %c0_i32 = arith.constant 0 : i32
    %c0_i32_0 = arith.constant 0 : i32
    return %arg1, %c0_i32 : i32, i32
  }
  func.func @transform_2(%arg0: i32, %arg1: i32) -> (i32, i32) {
    %c0_i32 = arith.constant 0 : i32
    %c0_i32_0 = arith.constant 0 : i32
    return %c0_i32, %arg0 : i32, i32
  }
  func.func @transform_3(%arg0: i32, %arg1: i32) -> (i32, i32) {
    %c0_i32 = arith.constant 0 : i32
    %c0_i32_0 = arith.constant 0 : i32
    return %c0_i32, %arg0 : i32, i32
  }
  func.func @transform_4(%arg0: i32, %arg1: i32) -> (i32, i32) {
    %c0_i32 = arith.constant 0 : i32
    %c0_i32_0 = arith.constant 0 : i32
    return %c0_i32, %arg0 : i32, i32
  }
  func.func @transform_5(%arg0: i32, %arg1: i32) -> (i32, i32) {
    %c0_i32 = arith.constant 0 : i32
    return %arg1, %arg0 : i32, i32
  }
  func.func @transform_6(%arg0: i32, %arg1: i32) -> (i32, i32) {
    %c0_i32 = arith.constant 0 : i32
    return %arg1, %arg0 : i32, i32
  }
}

</mosaic_0001>

<llo_original>
// kernel: tpu_custom_call.1
$region0: #{tpu_custom_call.1}
  #allocation0 [shape = 'u32[]', space=smem, size = 0x4, offset = 0x4, fixed_abs, tag = 'smem constant byte address 0x4 - core index']
  #allocation1 [shape = 'u32[144,128]{1,0:T(1,128)}', space=vmem, size = 0x12000, scoped, tag = 'internal scratch']
  %s0 = inlined_call_operand.vmem [shape: f32[8,64], index: 0, kind: input, shape index: {}]
  %s1 = inlined_call_operand.vmem [shape: s32[8,1], index: 1, kind: input, shape index: {}]
  %s2 = inlined_call_operand.hbm [shape: f32[64,128], index: 2, kind: input, shape index: {}]
  %s3 = inlined_call_operand.vmem [shape: f32[1,128], index: 3, kind: input, shape index: {}]
  %s4 = inlined_call_operand.vmem [shape: f32[1,128], index: 4, kind: input, shape index: {}]
  %s5 = inlined_call_operand.hbm [shape: f32[8,128], index: 5, kind: output, shape index: {0}]
  %s6 = inlined_call_operand.hbm [shape: f32[8,128], index: 6, kind: output, shape index: {1}]
  %7 = xla_tuple %s5, %s6
  %s8 = sld [smem:[#allocation0]]
  $region42: #{tpu_custom_call.1} parent=0
    _
  %s10 = ssub.s32 1, %s8
  %s11 = scalar_select 0, %s10, %s8
  $region1: #{tpu_custom_call.1} parent=0
    #allocation2 [shape = 'u8[32768]{0}', space=vmem, size = 0x8000, scoped, tag = 'input window, operand 2, single buffered']
    #allocation3 [shape = 's32[1]{0}', space=sflag, size = 0x4, scoped, tag = 'scoped memory for tpu_custom_call.1']
    #allocation4 [shape = 's32[1]{0}', space=sflag, size = 0x4, scoped, tag = 'scoped memory for tpu_custom_call.1']
    #allocation5 [shape = 'u8[4096]{0}', space=vmem, size = 0x1000, scoped, tag = 'output window, operand 0, single buffered']
    #allocation6 [shape = 'u8[4096]{0}', space=vmem, size = 0x1000, scoped, tag = 'output window, operand 1, single buffered']
    #allocation7 [shape = 's32[1]{0}', space=sflag, size = 0x4, scoped, tag = 'scoped memory for tpu_custom_call.1']
    %12 = vsyncpa [#allocation3], 0
    %13 = vsyncpa [#allocation4], 0
    %14 = vsyncpa [#allocation7], 0
    // Predicated region
    $region2: #{tpu_custom_call.1} parent=1 // pred_check
      _
    $region3: #{tpu_custom_call.1} parent=1 // pred_check_branch
      %16 = sbr.rel (0) target = $region5
    $region4: #{tpu_custom_call.1} parent=1 // pred_region
      _
    $region5: #{tpu_custom_call.1} parent=1 // pred_fallthru
      _
    // Predicated region
    $region6: #{tpu_custom_call.1} parent=1 // pred_check
      _
    $region7: #{tpu_custom_call.1} parent=1 // pred_check_branch
      %18 = sbr.rel (0) target = $region9
    $region8: #{tpu_custom_call.1} parent=1 // pred_region
      _
    $region9: #{tpu_custom_call.1} parent=1 // pred_fallthru
      _
    // Predicated region
    $region10: #{tpu_custom_call.1} parent=1 // pred_check
      _
    $region11: #{tpu_custom_call.1} parent=1 // pred_check_branch
      %20 = sbr.rel (0) target = $region13
    $region12: #{tpu_custom_call.1} parent=1 // pred_region
      %s22 = ssub.s32 1024, 1024
      %23 = vsyncadd [#allocation3], %s22
      %s24 = sshll.u32 [#allocation2], 4
      %s25 = int_to_ptr.vmem [resolvable:$true] %s24
      %30 = dma.hbm_to_vmem [thread:$0]  %s2, 1024, %s25, [#allocation3], 128, 128, 8
    $region13: #{tpu_custom_call.1} parent=1 // pred_fallthru
      _
    // Predicated region
    $region14: #{tpu_custom_call.1} parent=1 // pred_check
      _
    $region15: #{tpu_custom_call.1} parent=1 // pred_check_branch
      %32 = sbr.rel (0) target = $region17
    $region16: #{tpu_custom_call.1} parent=1 // pred_region
      _
    $region17: #{tpu_custom_call.1} parent=1 // pred_fallthru
      _
    // Predicated region
    $region18: #{tpu_custom_call.1} parent=1 // pred_check
      _
    $region19: #{tpu_custom_call.1} parent=1 // pred_check_branch
      %34 = sbr.rel (0) target = $region21
    $region20: #{tpu_custom_call.1} parent=1 // pred_region
      _
    $region21: #{tpu_custom_call.1} parent=1 // pred_fallthru
      _
    // Predicated region
    $region22: #{tpu_custom_call.1} parent=1 // pred_check
      _
    $region23: #{tpu_custom_call.1} parent=1 // pred_check_branch
      %36 = sbr.rel (0) target = $region25
    $region24: #{tpu_custom_call.1} parent=1 // pred_region
      %37 = dma.done [#allocation3], 1024
    $region25: #{tpu_custom_call.1} parent=1 // pred_fallthru
      _
    %v38 = vld [vmem:[%s0] sm:$0xff]
    %v39 = vld [vmem:[#allocation2] sm:$0xff]
    %v40 = vld [vmem:[#allocation2 + $0x8] sm:$0xff]
    %v41 = vld [vmem:[#allocation2 + $0x10] sm:$0xff]
    %v42 = vld [vmem:[#allocation2 + $0x18] sm:$0xff]
    %v43 = vld [vmem:[#allocation2 + $0x20] sm:$0xff]
    %v44 = vld [vmem:[#allocation2 + $0x28] sm:$0xff]
    %v45 = vld [vmem:[#allocation2 + $0x30] sm:$0xff]
    %v46 = vld [vmem:[#allocation2 + $0x38] sm:$0xff]
    %v47 = vld [vmem:[%s4] sm:$0x1]
    %v49 = vlaneseq
    %v50 = vshrl.u32 %v49, 7
    %v51 = vsub.s32 0, %v50
    %v52 = vrot.slane %v47, %v51
    %vm54 = vcmask 523264
    %v56 = vsel %vm54, %v38, 0
    %58 = vmatprep.subr.mxu0 0.0
    %59 = vmatpush1.msra.mxu0 %v39
    %60 = vmatprep.subr.mxu0 0.0
    %61 = vmatpush1.msra.mxu0 %v40
    %62 = vmatprep.subr.mxu0 0.0
    %63 = vmatpush1.msra.mxu0 %v41
    %64 = vmatprep.subr.mxu0 0.0
    %65 = vmatpush1.msra.mxu0 %v42
    %66 = vmatprep.subr.mxu0 0.0
    %67 = vmatpush1.msra.mxu0 %v43
    %68 = vmatprep.subr.mxu0 0.0
    %69 = vmatpush1.msra.mxu0 %v44
    %70 = vmatprep.subr.mxu0 0.0
    %71 = vmatpush1.msra.mxu0 %v45
    %72 = vmatprep.subr.mxu0 0.0
    %73 = vmatpush1.msra.mxu0 %v46
    %74 = vmatprep.subr.mxu0 0.0
    %75 = vmatpush1.msra.mxu0 0.0
    %76 = vmatprep.subr.mxu0 0.0
    %77 = vmatpush1.msra.mxu0 0.0
    %78 = vmatprep.subr.mxu0 0.0
    %79 = vmatpush1.msra.mxu0 0.0
    %80 = vmatprep.subr.mxu0 0.0
    %81 = vmatpush1.msra.mxu0 0.0
    %82 = vmatprep.subr.mxu0 0.0
    %83 = vmatpush1.msra.mxu0 0.0
    %84 = vmatprep.subr.mxu0 0.0
    %85 = vmatpush1.msra.mxu0 0.0
    %86 = vmatprep.subr.mxu0 0.0
    %87 = vmatpush1.msra.mxu0 0.0
    %88 = vmatprep.subr.mxu0 0.0
    %89 = vmatpush1.msra.mxu0 0.0
    %90 = vmatprep.subr.mxu0 0.0
    %91 = vmatpush1.msra.mxu0 0.0
    %92 = vmatprep.subr.mxu0 0.0
    %93 = vmatpush1.msra.mxu0 0.0
    %94 = vmatprep.subr.mxu0 0.0
    %95 = vmatpush1.msra.mxu0 0.0
    %96 = vmatprep.subr.mxu0 0.0
    %97 = vmatpush1.msra.mxu0 0.0
    %98 = vmatprep.subr.mxu0 0.0
    %99 = vmatpush1.msra.mxu0 0.0
    %100 = vmatprep.subr.mxu0 0.0
    %101 = vmatpush1.msra.mxu0 0.0
    %102 = vmatprep.subr.mxu0 0.0
    %103 = vmatpush1.msra.mxu0 0.0
    %104 = vmatprep.subr.mxu0 0.0
    %105 = vmatpush1.msra.mxu0 0.0
    %106 = vmatprep.subr.mxu0 0.0
    %107 = vmatpush1.msra.mxu0 0.0
    %108 = vmatprep.subr.mxu0 0.0
    %109 = vmatpush1.msra.mxu0 0.0
    %110 = vmatprep.subr.mxu0 0.0
    %111 = vmatpush1.msra.mxu0 0.0
    %112 = vmatprep.subr.mxu0 0.0
    %113 = vmatpush1.msra.mxu0 0.0
    %114 = vmatprep.subr.mxu0 0.0
    %115 = vmatpush1.msra.mxu0 0.0
    %116 = vmatprep.subr.mxu0 0.0
    %117 = vmatpush1.msra.mxu0 0.0
    %118 = vmatprep.subr.mxu0 0.0
    %119 = vmatpush1.msra.mxu0 0.0
    %120 = vmatprep.subr.mxu0 0.0
    %121 = vmatpush1.msra.mxu0 0.0
    %122 = vmatprep.mubr.f32.mxu0 0.0
    %123 = vmatmul.mubr.f32.gmra.mrb[0].mxu0 %v56
    %v124 = vpop.f32.mrb[0].mxu0
    %v125 = vadd.f32 %v52, %v124
    %v126 = vpop.f32.mrb[0].mxu0
    %127 = vdwg.mxu0
    %v128 = vld [vmem:[%s3] sm:$0x1]
    %v130 = vlaneseq
    %v131 = vshrl.u32 %v130, 7
    %v132 = vsub.s32 0, %v131
    %v133 = vrot.slane %v128, %v132
    %v135 = vadd.f32 %v133, %v125
    %v136 = vmul.f32 %v135, -0.5
    %137 = vst [vmem:[#allocation5] sm:$0xff] %v136
    %v138 = vlaneseq
    %v139 = vand.u32 %v138, 127
    %s140 = smul.u32 0, 128
    %v141 = vstv %s140
    %v142 = vadd.s32 %v139, %v141
    %v143 = vld [vmem:[%s1] sm:$0xff]
    %144 = vset.pattern.permute.xlu0 0
    %145 = vperm.xlu0 %144, %v143
    %v146 = vpop.permute.xlu0 %145
    %vm147 = vcmp.eq.s32.totalorder %v142, %v146
    %v148 = vmul.f32 %v125, 0.05
    %v149 = vsub.f32 %v136, %v148
    %v150 = vsel %vm147, %v149, %v136
    %151 = vst [vmem:[#allocation6] sm:$0xff] %v150
    // Predicated region
    $region26: #{tpu_custom_call.1} parent=1 // pred_check
      _
    $region27: #{tpu_custom_call.1} parent=1 // pred_check_branch
      %153 = sbr.rel (0) target = $region29
    $region28: #{tpu_custom_call.1} parent=1 // pred_region
      %s155 = ssub.s32 128, 128
      %156 = vsyncadd [#allocation4], %s155
      %s158 = sshll.u32 [#allocation5], 4
      %s159 = int_to_ptr.vmem [resolvable:$true] %s158
      %161 = dma.vmem_to_hbm [thread:$0]  %s159, 128, %s5, [#allocation4]
    $region29: #{tpu_custom_call.1} parent=1 // pred_fallthru
      _
    // Predicated region
    $region30: #{tpu_custom_call.1} parent=1 // pred_check
      _
    $region31: #{tpu_custom_call.1} parent=1 // pred_check_branch
      %163 = sbr.rel (0) target = $region33
    $region32: #{tpu_custom_call.1} parent=1 // pred_region
      %s165 = ssub.s32 128, 128
      %166 = vsyncadd [#allocation7], %s165
      %s168 = sshll.u32 [#allocation6], 4
      %s169 = int_to_ptr.vmem [resolvable:$true] %s168
      %171 = dma.vmem_to_hbm [thread:$0]  %s169, 128, %s6, [#allocation7]
    $region33: #{tpu_custom_call.1} parent=1 // pred_fallthru
      _
    // Predicated region
    $region34: #{tpu_custom_call.1} parent=1 // pred_check
      _
    $region35: #{tpu_custom_call.1} parent=1 // pred_check_branch
      %173 = sbr.rel (0) target = $region37
    $region36: #{tpu_custom_call.1} parent=1 // pred_region
      %174 = dma.done [#allocation4], 128
    $region37: #{tpu_custom_call.1} parent=1 // pred_fallthru
      _
    // Predicated region
    $region38: #{tpu_custom_call.1} parent=1 // pred_check
      _
    $region39: #{tpu_custom_call.1} parent=1 // pred_check_branch
      %176 = sbr.rel (0) target = $region41
    $region40: #{tpu_custom_call.1} parent=1 // pred_region
      %177 = dma.done [#allocation7], 128
    $region41: #{tpu_custom_call.1} parent=1 // pred_fallthru
      _
    %178 = vsyncpa [#allocation3], 1
    %179 = vsyncpa [#allocation4], 1
    %180 = vsyncpa [#allocation7], 1

</llo_original>
